<compile_context>
chip_gen: v5e
topology: v5e:2x2
jax: 0.10.0
libtpu: 0.0.40
codegen_flags: <defaults>
</compile_context>

<pallas_src>
import functools

import jax
import jax.numpy as jnp
from jax import lax
from jax.experimental import pallas as pl
from jax.experimental.pallas import tpu as pltpu


def _round_up(x, m):
    return (x + m - 1) // m * m


def _choose_tm(m, kp, op, budget_bytes=12 << 20):
    """Largest M-tile whose double-buffered working set fits a conservative
    VMEM budget (safe under default scoped limits on v5e/v6e/v7x)."""
    m8 = _round_up(m, 8)
    best = 8
    for tm in (8, 16, 32, 64, 128, 256, 512, 1024, 2048):
        if tm > m8:
            break
        need = (tm * kp * 2 * 2      # bf16 P tile, double-buffered
                + kp * op * 2 * 2    # bf16 resident weight block (x2 safety)
                + tm * op * 4 * 2)   # f32 y tile, double-buffered
        if need <= budget_bytes:
            best = tm
    # Keep >=2 grid steps when possible so the auto-pipeline can overlap the
    # next P-tile DMA with the current matmul.
    if best >= m8 and best > 8:
        best //= 2
    return best


# ----------------------------------------------------------------------------
# Pass 1: tiled matmul (bf16 MXU, f32 accumulate) + per-tile channel stats
# ----------------------------------------------------------------------------
def _matmul_stats_kernel(p_ref, w_ref, y_ref, sum_ref, ssq_ref):
    # p_ref: (TM, Kp) bf16, w_ref: (Kp, Op) bf16 (chan_mul already folded in)
    y = jnp.dot(p_ref[...], w_ref[...], preferred_element_type=jnp.float32)
    y_ref[...] = y
    # Per-tile partial BN statistics (padded rows are exact zeros -> no mask).
    sum_ref[0] = jnp.sum(y, axis=0, keepdims=True)          # (1, Op)
    ssq_ref[0] = jnp.sum(y * y, axis=0, keepdims=True)       # (1, Op)


# ----------------------------------------------------------------------------
# Pass 2: cheap mem-bound normalize (+ ReLU)
# ----------------------------------------------------------------------------
def _bn_relu_kernel(y_ref, scale_ref, shift_ref, o_ref, *, apply_relu):
    out = y_ref[...] * scale_ref[...] + shift_ref[...]
    if apply_relu:
        out = jnp.maximum(out, 0.0)
    o_ref[...] = out.astype(o_ref.dtype)


# ----------------------------------------------------------------------------
# im2col for 3x3, stride 1, pad 1 -- NHWC / M-major, K-contiguous (kh, kw, c)
# ----------------------------------------------------------------------------
def _im2col_s1p1k3(x_nchw):
    N, C, H, W = x_nchw.shape
    x = jnp.transpose(x_nchw.astype(jnp.bfloat16), (0, 2, 3, 1))      # NHWC
    xp = jnp.pad(x, ((0, 0), (1, 1), (1, 1), (0, 0)))
    taps = [xp[:, kh:kh + H, kw:kw + W, :]
            for kh in range(3) for kw in range(3)]                     # 9x (N,H,W,C)
    patches = jnp.concatenate(taps, axis=-1)                           # (N,H,W,9C)
    return patches.reshape(N * H * W, 9 * C)                           # (M, K)


# ----------------------------------------------------------------------------
# Fused conv + per-channel scale + train-mode BN + ReLU (two tiled passes)
# ----------------------------------------------------------------------------
@jax.jit
def conv_bn_relu(x, w, chan_mul, gamma, beta, eps=1e-5):
    N, Cin, H, W = x.shape
    O = w.shape[0]
    K = 9 * Cin
    M = N * H * W

    # Fold per-output-channel multiplier into W in f32, then cast to bf16.
    # (conv(x, w*pr) * sel == conv(x, w) * (pr*sel) per output channel.)
    Wm = w.transpose(2, 3, 1, 0).reshape(K, O) * chan_mul.reshape(1, O)

    Op = _round_up(O, 128)            # lane-dense output / weight columns
    Kp = _round_up(K, 16)             # bf16 sublane packing for the K axis
    TM = _choose_tm(M, Kp, Op)
    Mp = _round_up(M, TM)
    n_tiles = Mp // TM

    P = _im2col_s1p1k3(x)                                              # (M, K) bf16
    Ppad = jnp.pad(P, ((0, Mp - M), (0, Kp - K)))                      # zero pad
    Wpad = jnp.pad(Wm, ((0, Kp - K), (0, Op - O))).astype(jnp.bfloat16)

    y, sums, ssq = pl.pallas_call(
        _matmul_stats_kernel,
        out_shape=(
            jax.ShapeDtypeStruct((Mp, Op), jnp.float32),               # conv output
            jax.ShapeDtypeStruct((n_tiles, 1, Op), jnp.float32),       # per-tile sum
            jax.ShapeDtypeStruct((n_tiles, 1, Op), jnp.float32),       # per-tile sumsq
        ),
        grid=(n_tiles,),
        in_specs=[pl.BlockSpec((TM, Kp), lambda i: (i, 0)),            # P tile
                  pl.BlockSpec((Kp, Op), lambda i: (0, 0))],           # resident W
        out_specs=(pl.BlockSpec((TM, Op), lambda i: (i, 0)),
                   pl.BlockSpec((1, 1, Op), lambda i: (i, 0, 0)),
                   pl.BlockSpec((1, 1, Op), lambda i: (i, 0, 0))),
        compiler_params=pltpu.CompilerParams(
            dimension_semantics=("parallel",)),
    )(Ppad, Wpad)

    # Tiny (n_tiles, O) reduction + BN scalar math in plain JAX (O(O) work).
    ch_sum = jnp.sum(sums[:, 0, :O], axis=0)
    ch_ssq = jnp.sum(ssq[:, 0, :O], axis=0)
    mean = ch_sum / M
    var = jnp.maximum(ch_ssq / M - mean * mean, 0.0)   # biased var (train BN)
    scale = gamma * lax.rsqrt(var + eps)
    shift = beta - mean * scale
    # Padded O..Op columns get scale=shift=0 -> exact zeros, sliced off below.
    scale_p = jnp.pad(scale.reshape(1, O), ((0, 0), (0, Op - O)))
    shift_p = jnp.pad(shift.reshape(1, O), ((0, 0), (0, Op - O)))

    out = pl.pallas_call(
        functools.partial(_bn_relu_kernel, apply_relu=True),
        out_shape=jax.ShapeDtypeStruct((Mp, Op), jnp.float32),
        grid=(n_tiles,),
        in_specs=[pl.BlockSpec((TM, Op), lambda i: (i, 0)),
                  pl.BlockSpec((1, Op), lambda i: (0, 0)),
                  pl.BlockSpec((1, Op), lambda i: (0, 0))],
        out_specs=pl.BlockSpec((TM, Op), lambda i: (i, 0)),
        compiler_params=pltpu.CompilerParams(
            dimension_semantics=("parallel",)),
    )(y, scale_p, shift_p)

    # (M, O) == (N, H, W, O) row-major; final transpose back to NCHW to match
    # the PyTorch module layout (an NHWC consumer could skip this).
    return out[:M, :O].reshape(N, H, W, O).transpose(0, 3, 1, 2)


# ----------------------------------------------------------------------------
# Module parameters (mirroring Convolution8.__init__ / reset_parameters)
# ----------------------------------------------------------------------------
def init_params(key, in_features, out_features):
    fan_out = out_features * 3 * 3                 # kaiming_normal_ fan_out/relu
    std = (2.0 / fan_out) ** 0.5
    return dict(
        weights=std * jax.random.normal(
            key, (out_features, in_features, 3, 3), jnp.float32),
        bn_gamma=jnp.ones((out_features,), jnp.float32),
        bn_beta=jnp.zeros((out_features,), jnp.float32),
    )


# ----------------------------------------------------------------------------
# Forward (Python-level branching on static `pattern` / `i`, like the module)
# ----------------------------------------------------------------------------
def convolution8_forward(params, inputs, sel=None, pr=None, i=None,
                         pattern=None):
    w = params['weights']
    O = w.shape[0]

    if pattern == 0:
        out = conv_bn_relu(inputs, w, jnp.ones((O,), jnp.float32),
                           params['bn_gamma'], params['bn_beta'])
        return out, inputs
    elif i == 0:
        # Weight-summary reductions over (O, Cin, 3, 3): far too small for a
        # kernel; keep as plain JAX glue.
        sel_avg = jnp.sum(jnp.mean(w, axis=(2, 3)), axis=1).reshape(1, O)
        pr_avg = jnp.mean(w, axis=(1, 2, 3)).reshape(1, O)
        return sel_avg, pr_avg
    elif i == 1:
        # conv(x, w*pr) * sel == conv(x, w) * (pr*sel) per output channel.
        mul = pr.reshape(O) * sel.reshape(O)
        out = conv_bn_relu(inputs, w, mul,
                           params['bn_gamma'], params['bn_beta'])
        return out, inputs


if __name__ == "__main__":
    key = jax.random.PRNGKey(0)
    kparam, kx, ksel = jax.random.split(key, 3)
    in_features, out_features = 4, 8
    params = init_params(kparam, in_features, out_features)
    x = jax.random.normal(kx, (2, in_features, 16, 16), jnp.float32)

    # pattern == 0 branch: conv + BN(train) + ReLU, passthrough inputs
    out0, pass0 = convolution8_forward(params, x, pattern=0)
    jax.block_until_ready((out0, pass0))

    # i == 0 branch: weight summaries
    sel_avg, pr_avg = convolution8_forward(params, x, i=0, pattern=1)
    jax.block_until_ready((sel_avg, pr_avg))

    # i == 1 branch: pruned / selected conv
    k1, k2 = jax.random.split(ksel)
    sel = jax.random.normal(k1, (1, out_features), jnp.float32)
    pr = jax.random.normal(k2, (1, out_features), jnp.float32)
    out1, pass1 = convolution8_forward(params, x, sel=sel, pr=pr, i=1,
                                       pattern=1)
    jax.block_until_ready((out1, pass1))

    assert out0.shape == (2, out_features, 16, 16)
    assert out1.shape == (2, out_features, 16, 16)
    assert sel_avg.shape == (1, out_features) and pr_avg.shape == (1, out_features)
    assert bool(jnp.all(jnp.isfinite(out0))) and bool(jnp.all(jnp.isfinite(out1)))
    print("KERNEL_OK")
</pallas_src>

<mosaic_0001>
module attributes {stable_mosaic.version = 11 : i64} {
  func.func @_matmul_stats_kernel(%arg0: i32, %arg1: memref<256x48xbf16, #tpu.memory_space<vmem>>, %arg2: memref<48x128xbf16, #tpu.memory_space<vmem>>, %arg3: memref<256x128xf32, #tpu.memory_space<vmem>>, %arg4: memref<1x1x128xf32, #tpu.memory_space<vmem>>, %arg5: memref<1x1x128xf32, #tpu.memory_space<vmem>>) attributes {dimension_semantics = [#tpu.dimension_semantics<parallel>], iteration_bounds = array<i64: 2>, scalar_prefetch = 0 : i64, scratch_operands = 0 : i64, tpu.core_type = #tpu.core_type<tc>, window_params = [{transform_indices = @transform_0, window_bounds = array<i64: 256, 48>}, {pipeline_mode = #tpu.pipeline_mode<synchronous>, transform_indices = @transform_1, window_bounds = array<i64: 48, 128>}, {transform_indices = @transform_2, window_bounds = array<i64: 256, 128>}, {transform_indices = @transform_3, window_bounds = array<i64: 1, 1, 128>}, {transform_indices = @transform_4, window_bounds = array<i64: 1, 1, 128>}]} {
    %c0 = arith.constant 0 : index
    %c0_0 = arith.constant 0 : index
    %0 = vector.load %arg1[%c0, %c0_0] : memref<256x48xbf16, #tpu.memory_space<vmem>>, vector<256x48xbf16>
    %c0_1 = arith.constant 0 : index
    %c0_2 = arith.constant 0 : index
    %1 = vector.load %arg2[%c0_1, %c0_2] : memref<48x128xbf16, #tpu.memory_space<vmem>>, vector<48x128xbf16>
    %cst = arith.constant dense<0.000000e+00> : vector<256x128xf32>
    %2 = tpu.matmul %0, %1, %cst {dimension_numbers = #tpu.dot_dimension_numbers<[1], [0], [0], [1], [0, 0, 1, 1], [], []>} : vector<256x48xbf16>, vector<48x128xbf16>, vector<256x128xf32> -> vector<256x128xf32>
    %c0_3 = arith.constant 0 : index
    %c0_4 = arith.constant 0 : index
    %3 = vector.load %arg3[%c0_3, %c0_4] : memref<256x128xf32, #tpu.memory_space<vmem>>, vector<256x128xf32>
    tpu.vector_store %arg3[%c0_3, %c0_4], %2 {strides = array<i32>} : memref<256x128xf32, #tpu.memory_space<vmem>>, vector<256x128xf32>,
    %cst_5 = arith.constant dense<0.000000e+00> : vector<128xf32>
    %4 = vector.multi_reduction <add>, %2, %cst_5 [0] : vector<256x128xf32> to vector<128xf32>
    %5 = vector.shape_cast %4 : vector<128xf32> to vector<1x128xf32>
    %c0_6 = arith.constant 0 : index
    %c0_7 = arith.constant 0 : index
    %c0_8 = arith.constant 0 : index
    %6 = vector.load %arg4[%c0_6, %c0_7, %c0_8] : memref<1x1x128xf32, #tpu.memory_space<vmem>>, vector<1x1x128xf32>
    %7 = vector.shape_cast %6 : vector<1x1x128xf32> to vector<1x128xf32>
    %8 = vector.shape_cast %5 : vector<1x128xf32> to vector<1x1x128xf32>
    tpu.vector_store %arg4[%c0_6, %c0_7, %c0_8], %8 {strides = array<i32>} : memref<1x1x128xf32, #tpu.memory_space<vmem>>, vector<1x1x128xf32>,
    %9 = arith.mulf %2, %2 : vector<256x128xf32>
    %cst_9 = arith.constant dense<0.000000e+00> : vector<128xf32>
    %10 = vector.multi_reduction <add>, %9, %cst_9 [0] : vector<256x128xf32> to vector<128xf32>
    %11 = vector.shape_cast %10 : vector<128xf32> to vector<1x128xf32>
    %c0_10 = arith.constant 0 : index
    %c0_11 = arith.constant 0 : index
    %c0_12 = arith.constant 0 : index
    %12 = vector.load %arg5[%c0_10, %c0_11, %c0_12] : memref<1x1x128xf32, #tpu.memory_space<vmem>>, vector<1x1x128xf32>
    %13 = vector.shape_cast %12 : vector<1x1x128xf32> to vector<1x128xf32>
    %14 = vector.shape_cast %11 : vector<1x128xf32> to vector<1x1x128xf32>
    tpu.vector_store %arg5[%c0_10, %c0_11, %c0_12], %14 {strides = array<i32>} : memref<1x1x128xf32, #tpu.memory_space<vmem>>, vector<1x1x128xf32>,
    return
  }
  func.func @transform_0(%arg0: i32) -> (i32, i32) {
    %c0_i32 = arith.constant 0 : i32
    %c0_i32_0 = arith.constant 0 : i32
    return %arg0, %c0_i32 : i32, i32
  }
  func.func @transform_1(%arg0: i32) -> (i32, i32) {
    %c0_i32 = arith.constant 0 : i32
    %c0_i32_0 = arith.constant 0 : i32
    %c0_i32_1 = arith.constant 0 : i32
    return %c0_i32, %c0_i32_0 : i32, i32
  }
  func.func @transform_2(%arg0: i32) -> (i32, i32) {
    %c0_i32 = arith.constant 0 : i32
    %c0_i32_0 = arith.constant 0 : i32
    return %arg0, %c0_i32 : i32, i32
  }
  func.func @transform_3(%arg0: i32) -> (i32, i32, i32) {
    %c0_i32 = arith.constant 0 : i32
    %c0_i32_0 = arith.constant 0 : i32
    %c0_i32_1 = arith.constant 0 : i32
    return %arg0, %c0_i32, %c0_i32_0 : i32, i32, i32
  }
  func.func @transform_4(%arg0: i32) -> (i32, i32, i32) {
    %c0_i32 = arith.constant 0 : i32
    %c0_i32_0 = arith.constant 0 : i32
    %c0_i32_1 = arith.constant 0 : i32
    return %arg0, %c0_i32, %c0_i32_0 : i32, i32, i32
  }
}

module attributes {stable_mosaic.version = 11 : i64} {
  func.func @_bn_relu_kernel(%arg0: i32, %arg1: memref<256x128xf32, #tpu.memory_space<vmem>>, %arg2: memref<1x128xf32, #tpu.memory_space<vmem>>, %arg3: memref<1x128xf32, #tpu.memory_space<vmem>>, %arg4: memref<256x128xf32, #tpu.memory_space<vmem>>) attributes {dimension_semantics = [#tpu.dimension_semantics<parallel>], iteration_bounds = array<i64: 2>, scalar_prefetch = 0 : i64, scratch_operands = 0 : i64, tpu.core_type = #tpu.core_type<tc>, window_params = [{transform_indices = @transform_0, window_bounds = array<i64: 256, 128>}, {pipeline_mode = #tpu.pipeline_mode<synchronous>, transform_indices = @transform_1, window_bounds = array<i64: 1, 128>}, {pipeline_mode = #tpu.pipeline_mode<synchronous>, transform_indices = @transform_2, window_bounds = array<i64: 1, 128>}, {transform_indices = @transform_3, window_bounds = array<i64: 256, 128>}]} {
    %c0 = arith.constant 0 : index
    %c0_0 = arith.constant 0 : index
    %0 = vector.load %arg1[%c0, %c0_0] : memref<256x128xf32, #tpu.memory_space<vmem>>, vector<256x128xf32>
    %c0_1 = arith.constant 0 : index
    %c0_2 = arith.constant 0 : index
    %1 = vector.load %arg2[%c0_1, %c0_2] : memref<1x128xf32, #tpu.memory_space<vmem>>, vector<1x128xf32>
    %2 = vector.broadcast %1 : vector<1x128xf32> to vector<256x128xf32>
    %3 = arith.mulf %0, %2 : vector<256x128xf32>
    %c0_3 = arith.constant 0 : index
    %c0_4 = arith.constant 0 : index
    %4 = vector.load %arg3[%c0_3, %c0_4] : memref<1x128xf32, #tpu.memory_space<vmem>>, vector<1x128xf32>
    %5 = vector.broadcast %4 : vector<1x128xf32> to vector<256x128xf32>
    %6 = arith.addf %3, %5 : vector<256x128xf32>
    %cst = arith.constant 0.000000e+00 : f32
    %7 = vector.broadcast %cst : f32 to vector<256x128xf32>
    %8 = arith.maximumf %6, %7 : vector<256x128xf32>
    %c0_5 = arith.constant 0 : index
    %c0_6 = arith.constant 0 : index
    %9 = vector.load %arg4[%c0_5, %c0_6] : memref<256x128xf32, #tpu.memory_space<vmem>>, vector<256x128xf32>
    tpu.vector_store %arg4[%c0_5, %c0_6], %8 {strides = array<i32>} : memref<256x128xf32, #tpu.memory_space<vmem>>, vector<256x128xf32>,
    return
  }
  func.func @transform_0(%arg0: i32) -> (i32, i32) {
    %c0_i32 = arith.constant 0 : i32
    %c0_i32_0 = arith.constant 0 : i32
    return %arg0, %c0_i32 : i32, i32
  }
  func.func @transform_1(%arg0: i32) -> (i32, i32) {
    %c0_i32 = arith.constant 0 : i32
    %c0_i32_0 = arith.constant 0 : i32
    %c0_i32_1 = arith.constant 0 : i32
    return %c0_i32, %c0_i32_0 : i32, i32
  }
  func.func @transform_2(%arg0: i32) -> (i32, i32) {
    %c0_i32 = arith.constant 0 : i32
    %c0_i32_0 = arith.constant 0 : i32
    %c0_i32_1 = arith.constant 0 : i32
    return %c0_i32, %c0_i32_0 : i32, i32
  }
  func.func @transform_3(%arg0: i32) -> (i32, i32) {
    %c0_i32 = arith.constant 0 : i32
    %c0_i32_0 = arith.constant 0 : i32
    return %arg0, %c0_i32 : i32, i32
  }
}

</mosaic_0001>

<llo_original>
// kernel: conv_bn_relu.3
$region0: #{conv_bn_relu.3}
  #allocation0 [shape = 'u32[]', space=smem, size = 0x4, offset = 0x4, fixed_abs, tag = 'smem constant byte address 0x4 - core index']
  #allocation1 [shape = 'u32[72,128]{1,0:T(1,128)}', space=vmem, size = 0x9000, scoped, tag = 'internal scratch']
  %s0 = inlined_call_operand.vmem [shape: f32[512,128], index: 0, kind: input, shape index: {}]
  %s1 = inlined_call_operand.vmem [shape: f32[1,128], index: 1, kind: input, shape index: {}]
  %s2 = inlined_call_operand.vmem [shape: f32[1,128], index: 2, kind: input, shape index: {}]
  %s3 = inlined_call_operand.vmem [shape: f32[512,128], index: 3, kind: output, shape index: {}]
  %s4 = sld [smem:[#allocation0]]
  $region45: #{conv_bn_relu.3} parent=0
    _
  %s6 = ssub.s32 1, %s4
  %s7 = scalar_select 0, %s6, %s4
  loop: start=0, step=1, limit=4
  $region2: #{conv_bn_relu.3} parent=0 // loop_pre_header
    _
  $region3: #{conv_bn_relu.3} parent=0 // loop_header
    %s9 = sphi 0, %s13
    %p10 = scmp.ge.s32.totalorder %s9, 4
    %s19 = sphi 0, %s21
    %s22 = sphi 0, %s19
    %s23 = sphi 0, %s22
    %s39 = sphi 0, %s23
    %s43 = sphi 0, %s43
    %s45 = sphi 0, %s43
    %s46 = sphi 0, %s45
    %s60 = sphi 0, %s46
    %s64 = sphi 0, %s64
    %s66 = sphi 0, %s64
    %s67 = sphi 0, %s66
    %s81 = sphi 0, %s67
    %s87 = sphi 0, %s89
    %s90 = sphi 0, %s87
    %s91 = sphi 0, %s90
    %s107 = sphi 0, %s91
  $region4: #{conv_bn_relu.3} parent=0 // loop_header_branch
    %12 = sbr.rel (%p10) target = $region8
  $region5: #{conv_bn_relu.3} parent=0 // loop_body
    %s14 = ssub.s32 %s9, 1
    %s15 = ssub.s32 %s9, 2
    %s16 = sadd.s32 %s9, 1
    %s17 = ssub.s32 %s9, %s16
    %p18 = scmp.eq.s32.totalorder %s17, 0
    %s20 = sadd.s32 %s19, 1
    %s21 = scalar_select %p18, %s19, %s20
    %p24 = pneg %p18
    %p25 = scmp.eq.s32.totalorder %s9, 1
    %p26 = por %p24, %p25
    %p27 = scmp.ne.s32.totalorder %s19, %s22
    %p28 = scmp.eq.s32.totalorder %s9, 0
    %p29 = por %p27, %p28
    %p30 = scmp.ne.s32.totalorder %s19, %s22
    %p31 = scmp.eq.s32.totalorder %s14, 1
    %p32 = por %p30, %p31
    %p33 = scmp.ne.s32.totalorder %s22, %s23
    %p34 = scmp.eq.s32.totalorder %s14, 0
    %p35 = por %p33, %p34
    %p36 = scmp.ne.s32.totalorder %s22, %s23
    %p37 = scmp.eq.s32.totalorder %s15, 1
    %p38 = por %p36, %p37
    %p40 = scmp.ne.s32.totalorder %s23, %s39
    %p41 = scmp.eq.s32.totalorder %s15, 0
    %p42 = por %p40, %p41
    %s44 = sadd.s32 %s43, 1
    %p47 = scmp.eq.s32.totalorder %s9, 1
    %p48 = scmp.ne.s32.totalorder %s43, %s45
    %p49 = scmp.eq.s32.totalorder %s9, 0
    %p50 = por %p48, %p49
    %p51 = scmp.ne.s32.totalorder %s43, %s45
    %p52 = scmp.eq.s32.totalorder %s14, 1
    %p53 = por %p51, %p52
    %p54 = scmp.ne.s32.totalorder %s45, %s46
    %p55 = scmp.eq.s32.totalorder %s14, 0
    %p56 = por %p54, %p55
    %p57 = scmp.ne.s32.totalorder %s45, %s46
    %p58 = scmp.eq.s32.totalorder %s15, 1
    %p59 = por %p57, %p58
    %p61 = scmp.ne.s32.totalorder %s46, %s60
    %p62 = scmp.eq.s32.totalorder %s15, 0
    %p63 = por %p61, %p62
    %s65 = sadd.s32 %s64, 1
    %p68 = scmp.eq.s32.totalorder %s9, 1
    %p69 = scmp.ne.s32.totalorder %s64, %s66
    %p70 = scmp.eq.s32.totalorder %s9, 0
    %p71 = por %p69, %p70
    %p72 = scmp.ne.s32.totalorder %s64, %s66
    %p73 = scmp.eq.s32.totalorder %s14, 1
    %p74 = por %p72, %p73
    %p75 = scmp.ne.s32.totalorder %s66, %s67
    %p76 = scmp.eq.s32.totalorder %s14, 0
    %p77 = por %p75, %p76
    %p78 = scmp.ne.s32.totalorder %s66, %s67
    %p79 = scmp.eq.s32.totalorder %s15, 1
    %p80 = por %p78, %p79
    %p82 = scmp.ne.s32.totalorder %s67, %s81
    %p83 = scmp.eq.s32.totalorder %s15, 0
    %p84 = por %p82, %p83
    %s85 = ssub.s32 %s9, %s16
    %p86 = scmp.eq.s32.totalorder %s85, 0
    %s88 = sadd.s32 %s87, 1
    %s89 = scalar_select %p86, %s87, %s88
    %p92 = pneg %p86
    %p93 = scmp.eq.s32.totalorder %s9, 1
    %p94 = por %p92, %p93
    %p95 = scmp.ne.s32.totalorder %s87, %s90
    %p96 = scmp.eq.s32.totalorder %s9, 0
    %p97 = por %p95, %p96
    %p98 = scmp.ne.s32.totalorder %s87, %s90
    %p99 = scmp.eq.s32.totalorder %s14, 1
    %p100 = por %p98, %p99
    %p101 = scmp.ne.s32.totalorder %s90, %s91
    %p102 = scmp.eq.s32.totalorder %s14, 0
    %p103 = por %p101, %p102
    %p104 = scmp.ne.s32.totalorder %s90, %s91
    %p105 = scmp.eq.s32.totalorder %s15, 1
    %p106 = por %p104, %p105
    %p108 = scmp.ne.s32.totalorder %s91, %s107
    %p109 = scmp.eq.s32.totalorder %s15, 0
    %p110 = por %p108, %p109
    %p111 = scmp.le.s32.totalorder 1, %s9
    %p112 = scmp.lt.s32.totalorder %s9, 3
    %p113 = pnand %p111, %p112
    %p114 = pneg %p113
    // Predicated region
    $region9: #{conv_bn_relu.3} parent=5 // pred_check
      _
    $region10: #{conv_bn_relu.3} parent=5 // pred_check_branch
      %116 = sbr.rel (%p113) target = $region12
    $region11: #{conv_bn_relu.3} parent=5 // pred_region
      %s117 = ssub.s32 %s9, 1
      // Predicated region
      $region13: #{conv_bn_relu.3} parent=11 // pred_check
        %p118 = pneg %p56
      $region14: #{conv_bn_relu.3} parent=11 // pred_check_branch
        %120 = sbr.rel (%p118) target = $region16
      $region15: #{conv_bn_relu.3} parent=11 // pred_region
        _
      $region16: #{conv_bn_relu.3} parent=11 // pred_fallthru
        _
      // Predicated region
      $region17: #{conv_bn_relu.3} parent=11 // pred_check
        %p121 = pneg %p77
      $region18: #{conv_bn_relu.3} parent=11 // pred_check_branch
        %123 = sbr.rel (%p121) target = $region20
      $region19: #{conv_bn_relu.3} parent=11 // pred_region
        _
      $region20: #{conv_bn_relu.3} parent=11 // pred_fallthru
        _
    $region12: #{conv_bn_relu.3} parent=5 // pred_fallthru
      _
    %p124 = scmp.lt.s32.totalorder %s9, 2
    // Predicated region
    $region21: #{conv_bn_relu.3} parent=5 // pred_check
      %p125 = pneg %p124
    $region22: #{conv_bn_relu.3} parent=5 // pred_check_branch
      %127 = sbr.rel (%p125) target = $region24
    $region23: #{conv_bn_relu.3} parent=5 // pred_region
      // Predicated region
      $region25: #{conv_bn_relu.3} parent=23 // pred_check
        %p128 = pneg %p29
      $region26: #{conv_bn_relu.3} parent=23 // pred_check_branch
        %130 = sbr.rel (%p128) target = $region28
      $region27: #{conv_bn_relu.3} parent=23 // pred_region
        %s131 = smul.u32 32, %s9
        %p132 = scmp.lt.s32.totalorder %s131, 63
        %s133 = scalar_select %p132, %s131, 63
        %s134 = smul.addr %s133, 8
        %s135 = scalar_lea.vmem %s0, %s134
        %s136 = smul.u32 32, %s9
      $region28: #{conv_bn_relu.3} parent=23 // pred_fallthru
        _
    $region24: #{conv_bn_relu.3} parent=5 // pred_fallthru
      _
    %p137 = scmp.le.s32.totalorder 1, %s9
    %p138 = scmp.lt.s32.totalorder %s9, 3
    %p139 = pnand %p137, %p138
    %p140 = pneg %p139
    // Predicated region
    $region29: #{conv_bn_relu.3} parent=5 // pred_check
      _
    $region30: #{conv_bn_relu.3} parent=5 // pred_check_branch
      %142 = sbr.rel (%p139) target = $region32
    $region31: #{conv_bn_relu.3} parent=5 // pred_region
      %s143 = ssub.s32 %s9, 1
      %s144 = smul.u32 32, %s14
      %p145 = scmp.lt.s32.totalorder %s144, 63
      %s146 = scalar_select %p145, %s144, 63
      %s147 = smul.addr %s146, 8
      %s148 = scalar_lea.vmem %s0, %s147
      %p149 = pneg %p35
      %p150 = pneg %p32
      %p151 = pneg %p56
      %p152 = pneg %p53
      %p153 = pneg %p77
      %p154 = pneg %p74
      %p155 = pneg %p103
      %p156 = pneg %p100
      %s157 = smul.u32 32, %s14
      %p158 = scmp.lt.s32.totalorder %s157, 63
      %s159 = scalar_select %p158, %s157, 63
      %s160 = smul.addr %s159, 8
      %s161 = scalar_lea.vmem %s3, %s160
      %s162 = smul.u32 32, %s14
      %p163 = scmp.lt.s32.totalorder %s162, 63
      %s164 = scalar_select %p163, %s162, 63
      %s165 = smul.addr %s164, 8
      %s166 = scalar_lea.vmem %s0, %s165
      %s167 = smul.u32 32, %s14
      %s168 = smul.u32 32, %s14
      %p169 = scmp.lt.s32.totalorder %s168, 63
      %s170 = scalar_select %p169, %s168, 63
      %s171 = smul.addr %s170, 8
      %s172 = scalar_lea.vmem %s3, %s171
      %s173 = smul.u32 32, %s14
      %v174 = vld [vmem:[%s166] sm:$0xff]
      %v175 = vld [vmem:[%s166 + $0x8] sm:$0xff]
      %v176 = vld [vmem:[%s166 + $0x10] sm:$0xff]
      %v177 = vld [vmem:[%s166 + $0x18] sm:$0xff]
      %v178 = vld [vmem:[%s166 + $0x20] sm:$0xff]
      %v179 = vld [vmem:[%s166 + $0x28] sm:$0xff]
      %v180 = vld [vmem:[%s166 + $0x30] sm:$0xff]
      %v181 = vld [vmem:[%s166 + $0x38] sm:$0xff]
      %v182 = vld [vmem:[%s166 + $0x40] sm:$0xff]
      %v183 = vld [vmem:[%s166 + $0x48] sm:$0xff]
      %v184 = vld [vmem:[%s166 + $0x50] sm:$0xff]
      %v185 = vld [vmem:[%s166 + $0x58] sm:$0xff]
      %v186 = vld [vmem:[%s166 + $0x60] sm:$0xff]
      %v187 = vld [vmem:[%s166 + $0x68] sm:$0xff]
      %v188 = vld [vmem:[%s166 + $0x70] sm:$0xff]
      %v189 = vld [vmem:[%s166 + $0x78] sm:$0xff]
      %v190 = vld [vmem:[%s166 + $0x80] sm:$0xff]
      %v191 = vld [vmem:[%s166 + $0x88] sm:$0xff]
      %v192 = vld [vmem:[%s166 + $0x90] sm:$0xff]
      %v193 = vld [vmem:[%s166 + $0x98] sm:$0xff]
      %v194 = vld [vmem:[%s166 + $0xa0] sm:$0xff]
      %v195 = vld [vmem:[%s166 + $0xa8] sm:$0xff]
      %v196 = vld [vmem:[%s166 + $0xb0] sm:$0xff]
      %v197 = vld [vmem:[%s166 + $0xb8] sm:$0xff]
      %v198 = vld [vmem:[%s166 + $0xc0] sm:$0xff]
      %v199 = vld [vmem:[%s166 + $0xc8] sm:$0xff]
      %v200 = vld [vmem:[%s166 + $0xd0] sm:$0xff]
      %v201 = vld [vmem:[%s166 + $0xd8] sm:$0xff]
      %v202 = vld [vmem:[%s166 + $0xe0] sm:$0xff]
      %v203 = vld [vmem:[%s166 + $0xe8] sm:$0xff]
      %v204 = vld [vmem:[%s166 + $0xf0] sm:$0xff]
      %v205 = vld [vmem:[%s166 + $0xf8] sm:$0xff]
      %v206 = vld [vmem:[%s1] sm:$0x1]
      %v208 = vperm.slane %v206, 0
      %v210 = vmul.f32 %v174, %v208
      %v211 = vmul.f32 %v175, %v208
      %v212 = vmul.f32 %v176, %v208
      %v213 = vmul.f32 %v177, %v208
      %v214 = vmul.f32 %v178, %v208
      %v215 = vmul.f32 %v179, %v208
      %v216 = vmul.f32 %v180, %v208
      %v217 = vmul.f32 %v181, %v208
      %v218 = vmul.f32 %v182, %v208
      %v219 = vmul.f32 %v183, %v208
      %v220 = vmul.f32 %v184, %v208
      %v221 = vmul.f32 %v185, %v208
      %v222 = vmul.f32 %v186, %v208
      %v223 = vmul.f32 %v187, %v208
      %v224 = vmul.f32 %v188, %v208
      %v225 = vmul.f32 %v189, %v208
      %v226 = vmul.f32 %v190, %v208
      %v227 = vmul.f32 %v191, %v208
      %v228 = vmul.f32 %v192, %v208
      %v229 = vmul.f32 %v193, %v208
      %v230 = vmul.f32 %v194, %v208
      %v231 = vmul.f32 %v195, %v208
      %v232 = vmul.f32 %v196, %v208
      %v233 = vmul.f32 %v197, %v208
      %v234 = vmul.f32 %v198, %v208
      %v235 = vmul.f32 %v199, %v208
      %v236 = vmul.f32 %v200, %v208
      %v237 = vmul.f32 %v201, %v208
      %v238 = vmul.f32 %v202, %v208
      %v239 = vmul.f32 %v203, %v208
      %v240 = vmul.f32 %v204, %v208
      %v241 = vmul.f32 %v205, %v208
      %v242 = vld [vmem:[%s2] sm:$0x1]
      %v244 = vperm.slane %v242, 0
      %v246 = vadd.f32 %v210, %v244
      %v247 = vadd.f32 %v211, %v244
      %v248 = vadd.f32 %v212, %v244
      %v249 = vadd.f32 %v213, %v244
      %v250 = vadd.f32 %v214, %v244
      %v251 = vadd.f32 %v215, %v244
      %v252 = vadd.f32 %v216, %v244
      %v253 = vadd.f32 %v217, %v244
      %v254 = vadd.f32 %v218, %v244
      %v255 = vadd.f32 %v219, %v244
      %v256 = vadd.f32 %v220, %v244
      %v257 = vadd.f32 %v221, %v244
      %v258 = vadd.f32 %v222, %v244
      %v259 = vadd.f32 %v223, %v244
      %v260 = vadd.f32 %v224, %v244
      %v261 = vadd.f32 %v225, %v244
      %v262 = vadd.f32 %v226, %v244
      %v263 = vadd.f32 %v227, %v244
      %v264 = vadd.f32 %v228, %v244
      %v265 = vadd.f32 %v229, %v244
      %v266 = vadd.f32 %v230, %v244
      %v267 = vadd.f32 %v231, %v244
      %v268 = vadd.f32 %v232, %v244
      %v269 = vadd.f32 %v233, %v244
      %v270 = vadd.f32 %v234, %v244
      %v271 = vadd.f32 %v235, %v244
      %v272 = vadd.f32 %v236, %v244
      %v273 = vadd.f32 %v237, %v244
      %v274 = vadd.f32 %v238, %v244
      %v275 = vadd.f32 %v239, %v244
      %v276 = vadd.f32 %v240, %v244
      %v277 = vadd.f32 %v241, %v244
      %v278 = vmax.f32 %v246, 0.0
      %v279 = vmax.f32 %v247, 0.0
      %v280 = vmax.f32 %v248, 0.0
      %v281 = vmax.f32 %v249, 0.0
      %v282 = vmax.f32 %v250, 0.0
      %v283 = vmax.f32 %v251, 0.0
      %v284 = vmax.f32 %v252, 0.0
      %v285 = vmax.f32 %v253, 0.0
      %v286 = vmax.f32 %v254, 0.0
      %v287 = vmax.f32 %v255, 0.0
      %v288 = vmax.f32 %v256, 0.0
      %v289 = vmax.f32 %v257, 0.0
      %v290 = vmax.f32 %v258, 0.0
      %v291 = vmax.f32 %v259, 0.0
      %v292 = vmax.f32 %v260, 0.0
      %v293 = vmax.f32 %v261, 0.0
      %v294 = vmax.f32 %v262, 0.0
      %v295 = vmax.f32 %v263, 0.0
      %v296 = vmax.f32 %v264, 0.0
      %v297 = vmax.f32 %v265, 0.0
      %v298 = vmax.f32 %v266, 0.0
      %v299 = vmax.f32 %v267, 0.0
      %v300 = vmax.f32 %v268, 0.0
      %v301 = vmax.f32 %v269, 0.0
      %v302 = vmax.f32 %v270, 0.0
      %v303 = vmax.f32 %v271, 0.0
      %v304 = vmax.f32 %v272, 0.0
      %v305 = vmax.f32 %v273, 0.0
      %v306 = vmax.f32 %v274, 0.0
      %v307 = vmax.f32 %v275, 0.0
      %v308 = vmax.f32 %v276, 0.0
      %v309 = vmax.f32 %v277, 0.0
      %310 = vst [vmem:[%s172] sm:$0xff] %v278
      %311 = vst [vmem:[%s172 + $0x8] sm:$0xff] %v279
      %312 = vst [vmem:[%s172 + $0x10] sm:$0xff] %v280
      %313 = vst [vmem:[%s172 + $0x18] sm:$0xff] %v281
      %314 = vst [vmem:[%s172 + $0x20] sm:$0xff] %v282
      %315 = vst [vmem:[%s172 + $0x28] sm:$0xff] %v283
      %316 = vst [vmem:[%s172 + $0x30] sm:$0xff] %v284
      %317 = vst [vmem:[%s172 + $0x38] sm:$0xff] %v285
      %318 = vst [vmem:[%s172 + $0x40] sm:$0xff] %v286
      %319 = vst [vmem:[%s172 + $0x48] sm:$0xff] %v287
      %320 = vst [vmem:[%s172 + $0x50] sm:$0xff] %v288
      %321 = vst [vmem:[%s172 + $0x58] sm:$0xff] %v289
      %322 = vst [vmem:[%s172 + $0x60] sm:$0xff] %v290
      %323 = vst [vmem:[%s172 + $0x68] sm:$0xff] %v291
      %324 = vst [vmem:[%s172 + $0x70] sm:$0xff] %v292
      %325 = vst [vmem:[%s172 + $0x78] sm:$0xff] %v293
      %326 = vst [vmem:[%s172 + $0x80] sm:$0xff] %v294
      %327 = vst [vmem:[%s172 + $0x88] sm:$0xff] %v295
      %328 = vst [vmem:[%s172 + $0x90] sm:$0xff] %v296
      %329 = vst [vmem:[%s172 + $0x98] sm:$0xff] %v297
      %330 = vst [vmem:[%s172 + $0xa0] sm:$0xff] %v298
      %331 = vst [vmem:[%s172 + $0xa8] sm:$0xff] %v299
      %332 = vst [vmem:[%s172 + $0xb0] sm:$0xff] %v300
      %333 = vst [vmem:[%s172 + $0xb8] sm:$0xff] %v301
      %334 = vst [vmem:[%s172 + $0xc0] sm:$0xff] %v302
      %335 = vst [vmem:[%s172 + $0xc8] sm:$0xff] %v303
      %336 = vst [vmem:[%s172 + $0xd0] sm:$0xff] %v304
      %337 = vst [vmem:[%s172 + $0xd8] sm:$0xff] %v305
      %338 = vst [vmem:[%s172 + $0xe0] sm:$0xff] %v306
      %339 = vst [vmem:[%s172 + $0xe8] sm:$0xff] %v307
      %340 = vst [vmem:[%s172 + $0xf0] sm:$0xff] %v308
      %341 = vst [vmem:[%s172 + $0xf8] sm:$0xff] %v309
      %s342 = smul.u32 32, %s14
      %p343 = scmp.lt.s32.totalorder %s342, 63
      %s344 = scalar_select %p343, %s342, 63
      %s345 = smul.addr %s344, 8
      %s346 = scalar_lea.vmem %s3, %s345
      // Predicated region
      $region33: #{conv_bn_relu.3} parent=31 // pred_check
        %p347 = pneg %p100
      $region34: #{conv_bn_relu.3} parent=31 // pred_check_branch
        %349 = sbr.rel (%p347) target = $region36
      $region35: #{conv_bn_relu.3} parent=31 // pred_region
        %s350 = smul.u32 32, %s14
      $region36: #{conv_bn_relu.3} parent=31 // pred_fallthru
        _
    $region32: #{conv_bn_relu.3} parent=5 // pred_fallthru
      _
    %p351 = scmp.le.s32.totalorder 2, %s9
    // Predicated region
    $region37: #{conv_bn_relu.3} parent=5 // pred_check
      %p352 = pneg %p351
    $region38: #{conv_bn_relu.3} parent=5 // pred_check_branch
      %354 = sbr.rel (%p352) target = $region40
    $region39: #{conv_bn_relu.3} parent=5 // pred_region
      %s355 = ssub.s32 %s9, 2
      // Predicated region
      $region41: #{conv_bn_relu.3} parent=39 // pred_check
        %p356 = pneg %p106
      $region42: #{conv_bn_relu.3} parent=39 // pred_check_branch
        %358 = sbr.rel (%p356) target = $region44
      $region43: #{conv_bn_relu.3} parent=39 // pred_region
        %s359 = smul.u32 32, %s15
        %p360 = scmp.lt.s32.totalorder %s359, 63
        %s361 = scalar_select %p360, %s359, 63
        %s362 = smul.addr %s361, 8
        %s363 = scalar_lea.vmem %s3, %s362
      $region44: #{conv_bn_relu.3} parent=39 // pred_fallthru
        _
    $region40: #{conv_bn_relu.3} parent=5 // pred_fallthru
      _
  $region6: #{conv_bn_relu.3} parent=0 // loop_footer
    %s13 = sadd.s32 1, %s9
  $region7: #{conv_bn_relu.3} parent=0 // loop_footer_branch
    %8 = sbr.rel target = $region3
  $region8: #{conv_bn_relu.3} parent=0 // loop_exit
    _

// kernel: conv_bn_relu.2
$region0: #{conv_bn_relu.2}
  #allocation0 [shape = 'u32[]', space=smem, size = 0x4, offset = 0x4, fixed_abs, tag = 'smem constant byte address 0x4 - core index']
  #allocation1 [shape = 'u32[72,128]{1,0:T(1,128)}', space=vmem, size = 0x9000, scoped, tag = 'internal scratch']
  %s0 = inlined_call_operand.vmem [shape: bf16[512,48], index: 0, kind: input, shape index: {}]
  %s1 = inlined_call_operand.vmem [shape: bf16[48,128], index: 1, kind: input, shape index: {}]
  %s2 = inlined_call_operand.vmem [shape: f32[512,128], index: 2, kind: output, shape index: {0}]
  %s3 = inlined_call_operand.vmem [shape: f32[2,1,128], index: 3, kind: output, shape index: {1}]
  %s4 = inlined_call_operand.vmem [shape: f32[2,1,128], index: 4, kind: output, shape index: {2}]
  %5 = xla_tuple %s2, %s3, %s4
  %s6 = sld [smem:[#allocation0]]
  $region57: #{conv_bn_relu.2} parent=0
    _
  %s8 = ssub.s32 1, %s6
  %s9 = scalar_select 0, %s8, %s6
  loop: start=0, step=1, limit=4
  $region2: #{conv_bn_relu.2} parent=0 // loop_pre_header
    _
  $region3: #{conv_bn_relu.2} parent=0 // loop_header
    %s11 = sphi 0, %s15
    %p12 = scmp.ge.s32.totalorder %s11, 4
    %s21 = sphi 0, %s23
    %s24 = sphi 0, %s21
    %s25 = sphi 0, %s24
    %s41 = sphi 0, %s25
    %s45 = sphi 0, %s45
    %s47 = sphi 0, %s45
    %s48 = sphi 0, %s47
    %s62 = sphi 0, %s48
    %s68 = sphi 0, %s70
    %s71 = sphi 0, %s68
    %s72 = sphi 0, %s71
    %s88 = sphi 0, %s72
    %s94 = sphi 0, %s96
    %s97 = sphi 0, %s94
    %s98 = sphi 0, %s97
    %s114 = sphi 0, %s98
    %s120 = sphi 0, %s122
    %s123 = sphi 0, %s120
    %s124 = sphi 0, %s123
    %s140 = sphi 0, %s124
  $region4: #{conv_bn_relu.2} parent=0 // loop_header_branch
    %14 = sbr.rel (%p12) target = $region8
  $region5: #{conv_bn_relu.2} parent=0 // loop_body
    %s16 = ssub.s32 %s11, 1
    %s17 = ssub.s32 %s11, 2
    %s18 = sadd.s32 %s11, 1
    %s19 = ssub.s32 %s11, %s18
    %p20 = scmp.eq.s32.totalorder %s19, 0
    %s22 = sadd.s32 %s21, 1
    %s23 = scalar_select %p20, %s21, %s22
    %p26 = pneg %p20
    %p27 = scmp.eq.s32.totalorder %s11, 1
    %p28 = por %p26, %p27
    %p29 = scmp.ne.s32.totalorder %s21, %s24
    %p30 = scmp.eq.s32.totalorder %s11, 0
    %p31 = por %p29, %p30
    %p32 = scmp.ne.s32.totalorder %s21, %s24
    %p33 = scmp.eq.s32.totalorder %s16, 1
    %p34 = por %p32, %p33
    %p35 = scmp.ne.s32.totalorder %s24, %s25
    %p36 = scmp.eq.s32.totalorder %s16, 0
    %p37 = por %p35, %p36
    %p38 = scmp.ne.s32.totalorder %s24, %s25
    %p39 = scmp.eq.s32.totalorder %s17, 1
    %p40 = por %p38, %p39
    %p42 = scmp.ne.s32.totalorder %s25, %s41
    %p43 = scmp.eq.s32.totalorder %s17, 0
    %p44 = por %p42, %p43
    %s46 = sadd.s32 %s45, 1
    %p49 = scmp.eq.s32.totalorder %s11, 1
    %p50 = scmp.ne.s32.totalorder %s45, %s47
    %p51 = scmp.eq.s32.totalorder %s11, 0
    %p52 = por %p50, %p51
    %p53 = scmp.ne.s32.totalorder %s45, %s47
    %p54 = scmp.eq.s32.totalorder %s16, 1
    %p55 = por %p53, %p54
    %p56 = scmp.ne.s32.totalorder %s47, %s48
    %p57 = scmp.eq.s32.totalorder %s16, 0
    %p58 = por %p56, %p57
    %p59 = scmp.ne.s32.totalorder %s47, %s48
    %p60 = scmp.eq.s32.totalorder %s17, 1
    %p61 = por %p59, %p60
    %p63 = scmp.ne.s32.totalorder %s48, %s62
    %p64 = scmp.eq.s32.totalorder %s17, 0
    %p65 = por %p63, %p64
    %s66 = ssub.s32 %s11, %s18
    %p67 = scmp.eq.s32.totalorder %s66, 0
    %s69 = sadd.s32 %s68, 1
    %s70 = scalar_select %p67, %s68, %s69
    %p73 = pneg %p67
    %p74 = scmp.eq.s32.totalorder %s11, 1
    %p75 = por %p73, %p74
    %p76 = scmp.ne.s32.totalorder %s68, %s71
    %p77 = scmp.eq.s32.totalorder %s11, 0
    %p78 = por %p76, %p77
    %p79 = scmp.ne.s32.totalorder %s68, %s71
    %p80 = scmp.eq.s32.totalorder %s16, 1
    %p81 = por %p79, %p80
    %p82 = scmp.ne.s32.totalorder %s71, %s72
    %p83 = scmp.eq.s32.totalorder %s16, 0
    %p84 = por %p82, %p83
    %p85 = scmp.ne.s32.totalorder %s71, %s72
    %p86 = scmp.eq.s32.totalorder %s17, 1
    %p87 = por %p85, %p86
    %p89 = scmp.ne.s32.totalorder %s72, %s88
    %p90 = scmp.eq.s32.totalorder %s17, 0
    %p91 = por %p89, %p90
    %s92 = ssub.s32 %s11, %s18
    %p93 = scmp.eq.s32.totalorder %s92, 0
    %s95 = sadd.s32 %s94, 1
    %s96 = scalar_select %p93, %s94, %s95
    %p99 = pneg %p93
    %p100 = scmp.eq.s32.totalorder %s11, 1
    %p101 = por %p99, %p100
    %p102 = scmp.ne.s32.totalorder %s94, %s97
    %p103 = scmp.eq.s32.totalorder %s11, 0
    %p104 = por %p102, %p103
    %p105 = scmp.ne.s32.totalorder %s94, %s97
    %p106 = scmp.eq.s32.totalorder %s16, 1
    %p107 = por %p105, %p106
    %p108 = scmp.ne.s32.totalorder %s97, %s98
    %p109 = scmp.eq.s32.totalorder %s16, 0
    %p110 = por %p108, %p109
    %p111 = scmp.ne.s32.totalorder %s97, %s98
    %p112 = scmp.eq.s32.totalorder %s17, 1
    %p113 = por %p111, %p112
    %p115 = scmp.ne.s32.totalorder %s98, %s114
    %p116 = scmp.eq.s32.totalorder %s17, 0
    %p117 = por %p115, %p116
    %s118 = ssub.s32 %s11, %s18
    %p119 = scmp.eq.s32.totalorder %s118, 0
    %s121 = sadd.s32 %s120, 1
    %s122 = scalar_select %p119, %s120, %s121
    %p125 = pneg %p119
    %p126 = scmp.eq.s32.totalorder %s11, 1
    %p127 = por %p125, %p126
    %p128 = scmp.ne.s32.totalorder %s120, %s123
    %p129 = scmp.eq.s32.totalorder %s11, 0
    %p130 = por %p128, %p129
    %p131 = scmp.ne.s32.totalorder %s120, %s123
    %p132 = scmp.eq.s32.totalorder %s16, 1
    %p133 = por %p131, %p132
    %p134 = scmp.ne.s32.totalorder %s123, %s124
    %p135 = scmp.eq.s32.totalorder %s16, 0
    %p136 = por %p134, %p135
    %p137 = scmp.ne.s32.totalorder %s123, %s124
    %p138 = scmp.eq.s32.totalorder %s17, 1
    %p139 = por %p137, %p138
    %p141 = scmp.ne.s32.totalorder %s124, %s140
    %p142 = scmp.eq.s32.totalorder %s17, 0
    %p143 = por %p141, %p142
    %p144 = scmp.le.s32.totalorder 1, %s11
    %p145 = scmp.lt.s32.totalorder %s11, 3
    %p146 = pnand %p144, %p145
    %p147 = pneg %p146
    // Predicated region
    $region9: #{conv_bn_relu.2} parent=5 // pred_check
      _
    $region10: #{conv_bn_relu.2} parent=5 // pred_check_branch
      %149 = sbr.rel (%p146) target = $region12
    $region11: #{conv_bn_relu.2} parent=5 // pred_region
      %s150 = ssub.s32 %s11, 1
      // Predicated region
      $region13: #{conv_bn_relu.2} parent=11 // pred_check
        %p151 = pneg %p58
      $region14: #{conv_bn_relu.2} parent=11 // pred_check_branch
        %153 = sbr.rel (%p151) target = $region16
      $region15: #{conv_bn_relu.2} parent=11 // pred_region
        _
      $region16: #{conv_bn_relu.2} parent=11 // pred_fallthru
        _
    $region12: #{conv_bn_relu.2} parent=5 // pred_fallthru
      _
    %p154 = scmp.lt.s32.totalorder %s11, 2
    // Predicated region
    $region17: #{conv_bn_relu.2} parent=5 // pred_check
      %p155 = pneg %p154
    $region18: #{conv_bn_relu.2} parent=5 // pred_check_branch
      %157 = sbr.rel (%p155) target = $region20
    $region19: #{conv_bn_relu.2} parent=5 // pred_region
      // Predicated region
      $region21: #{conv_bn_relu.2} parent=19 // pred_check
        %p158 = pneg %p31
      $region22: #{conv_bn_relu.2} parent=19 // pred_check_branch
        %160 = sbr.rel (%p158) target = $region24
      $region23: #{conv_bn_relu.2} parent=19 // pred_region
        %s161 = smul.u32 32, %s11
        %p162 = scmp.lt.s32.totalorder %s161, 63
        %s163 = scalar_select %p162, %s161, 63
        %s164 = smul.addr %s163, 4
        %s165 = scalar_lea.vmem %s0, %s164
        %s166 = smul.u32 32, %s11
      $region24: #{conv_bn_relu.2} parent=19 // pred_fallthru
        _
    $region20: #{conv_bn_relu.2} parent=5 // pred_fallthru
      _
    %p167 = scmp.le.s32.totalorder 1, %s11
    %p168 = scmp.lt.s32.totalorder %s11, 3
    %p169 = pnand %p167, %p168
    %p170 = pneg %p169
    // Predicated region
    $region25: #{conv_bn_relu.2} parent=5 // pred_check
      _
    $region26: #{conv_bn_relu.2} parent=5 // pred_check_branch
      %172 = sbr.rel (%p169) target = $region28
    $region27: #{conv_bn_relu.2} parent=5 // pred_region
      %s173 = ssub.s32 %s11, 1
      %s174 = smul.u32 32, %s16
      %p175 = scmp.lt.s32.totalorder %s174, 63
      %s176 = scalar_select %p175, %s174, 63
      %s177 = smul.addr %s176, 4
      %s178 = scalar_lea.vmem %s0, %s177
      %p179 = pneg %p37
      %p180 = pneg %p34
      %p181 = pneg %p58
      %p182 = pneg %p55
      %p183 = pneg %p84
      %p184 = pneg %p81
      %s185 = smul.u32 32, %s16
      %p186 = scmp.lt.s32.totalorder %s185, 63
      %s187 = scalar_select %p186, %s185, 63
      %s188 = smul.addr %s187, 8
      %s189 = scalar_lea.vmem %s2, %s188
      %p190 = pneg %p110
      %p191 = pneg %p107
      %p192 = scmp.lt.s32.totalorder %s16, 1
      %s193 = scalar_select %p192, %s16, 1
      %s194 = scalar_lea.vmem %s3, %s193
      %p195 = pneg %p136
      %p196 = pneg %p133
      %p197 = scmp.lt.s32.totalorder %s16, 1
      %s198 = scalar_select %p197, %s16, 1
      %s199 = scalar_lea.vmem %s4, %s198
      %s200 = smul.u32 32, %s16
      %p201 = scmp.lt.s32.totalorder %s200, 63
      %s202 = scalar_select %p201, %s200, 63
      %s203 = smul.addr %s202, 4
      %s204 = scalar_lea.vmem %s0, %s203
      %s205 = smul.u32 32, %s16
      %s206 = smul.u32 32, %s16
      %p207 = scmp.lt.s32.totalorder %s206, 63
      %s208 = scalar_select %p207, %s206, 63
      %s209 = smul.addr %s208, 8
      %s210 = scalar_lea.vmem %s2, %s209
      %s211 = smul.u32 32, %s16
      %p212 = scmp.lt.s32.totalorder %s16, 1
      %s213 = scalar_select %p212, %s16, 1
      %s214 = scalar_lea.vmem %s3, %s213
      %p215 = scmp.lt.s32.totalorder %s16, 1
      %s216 = scalar_select %p215, %s16, 1
      %s217 = scalar_lea.vmem %s4, %s216
      %v219 = vld [vmem:[%s204] sm:$0xf]
      %v220 = vld [vmem:[%s204 + $0x4] sm:$0xf]
      %v221 = vld [vmem:[%s204 + $0x8] sm:$0xf]
      %v222 = vld [vmem:[%s204 + $0xc] sm:$0xf]
      %v223 = vld [vmem:[%s204 + $0x10] sm:$0xf]
      %v224 = vld [vmem:[%s204 + $0x14] sm:$0xf]
      %v225 = vld [vmem:[%s204 + $0x18] sm:$0xf]
      %v226 = vld [vmem:[%s204 + $0x1c] sm:$0xf]
      %v227 = vld [vmem:[%s204 + $0x20] sm:$0xf]
      %v228 = vld [vmem:[%s204 + $0x24] sm:$0xf]
      %v229 = vld [vmem:[%s204 + $0x28] sm:$0xf]
      %v230 = vld [vmem:[%s204 + $0x2c] sm:$0xf]
      %v231 = vld [vmem:[%s204 + $0x30] sm:$0xf]
      %v232 = vld [vmem:[%s204 + $0x34] sm:$0xf]
      %v233 = vld [vmem:[%s204 + $0x38] sm:$0xf]
      %v234 = vld [vmem:[%s204 + $0x3c] sm:$0xf]
      %v235 = vld [vmem:[%s204 + $0x40] sm:$0xf]
      %v236 = vld [vmem:[%s204 + $0x44] sm:$0xf]
      %v237 = vld [vmem:[%s204 + $0x48] sm:$0xf]
      %v238 = vld [vmem:[%s204 + $0x4c] sm:$0xf]
      %v239 = vld [vmem:[%s204 + $0x50] sm:$0xf]
      %v240 = vld [vmem:[%s204 + $0x54] sm:$0xf]
      %v241 = vld [vmem:[%s204 + $0x58] sm:$0xf]
      %v242 = vld [vmem:[%s204 + $0x5c] sm:$0xf]
      %v243 = vld [vmem:[%s204 + $0x60] sm:$0xf]
      %v244 = vld [vmem:[%s204 + $0x64] sm:$0xf]
      %v245 = vld [vmem:[%s204 + $0x68] sm:$0xf]
      %v246 = vld [vmem:[%s204 + $0x6c] sm:$0xf]
      %v247 = vld [vmem:[%s204 + $0x70] sm:$0xf]
      %v248 = vld [vmem:[%s204 + $0x74] sm:$0xf]
      %v249 = vld [vmem:[%s204 + $0x78] sm:$0xf]
      %v250 = vld [vmem:[%s204 + $0x7c] sm:$0xf]
      %v251 = vld [vmem:[%s1] sm:$0xf]
      %v252 = vld [vmem:[%s1 + $0x4] sm:$0xf]
      %v253 = vld [vmem:[%s1 + $0x8] sm:$0xf]
      %v254 = vld [vmem:[%s1 + $0xc] sm:$0xf]
      %v255 = vld [vmem:[%s1 + $0x10] sm:$0xf]
      %v256 = vld [vmem:[%s1 + $0x14] sm:$0xf]
      %v289 = vunpack.c.l.b16 %v219
      %v290 = vunpack.c.l.b16 %v220
      %v291 = vunpack.c.l.b16 %v221
      %v292 = vunpack.c.l.b16 %v222
      %v293 = vunpack.c.l.b16 %v223
      %v294 = vunpack.c.l.b16 %v224
      %v295 = vunpack.c.l.b16 %v225
      %v296 = vunpack.c.l.b16 %v226
      %v297 = vunpack.c.l.b16 %v227
      %v298 = vunpack.c.l.b16 %v228
      %v299 = vunpack.c.l.b16 %v229
      %v300 = vunpack.c.l.b16 %v230
      %v301 = vunpack.c.l.b16 %v231
      %v302 = vunpack.c.l.b16 %v232
      %v303 = vunpack.c.l.b16 %v233
      %v304 = vunpack.c.l.b16 %v234
      %v305 = vunpack.c.l.b16 %v235
      %v306 = vunpack.c.l.b16 %v236
      %v307 = vunpack.c.l.b16 %v237
      %v308 = vunpack.c.l.b16 %v238
      %v309 = vunpack.c.l.b16 %v239
      %v310 = vunpack.c.l.b16 %v240
      %v311 = vunpack.c.l.b16 %v241
      %v312 = vunpack.c.l.b16 %v242
      %v313 = vunpack.c.l.b16 %v243
      %v314 = vunpack.c.l.b16 %v244
      %v315 = vunpack.c.l.b16 %v245
      %v316 = vunpack.c.l.b16 %v246
      %v317 = vunpack.c.l.b16 %v247
      %v318 = vunpack.c.l.b16 %v248
      %v319 = vunpack.c.l.b16 %v249
      %v320 = vunpack.c.l.b16 %v250
      %v321 = vpack.c.b16 %v290, %v289
      %v322 = vpack.c.b16 %v292, %v291
      %v323 = vpack.c.b16 %v294, %v293
      %v324 = vpack.c.b16 %v296, %v295
      %v325 = vpack.c.b16 %v298, %v297
      %v326 = vpack.c.b16 %v300, %v299
      %v327 = vpack.c.b16 %v302, %v301
      %v328 = vpack.c.b16 %v304, %v303
      %v329 = vpack.c.b16 %v306, %v305
      %v330 = vpack.c.b16 %v308, %v307
      %v331 = vpack.c.b16 %v310, %v309
      %v332 = vpack.c.b16 %v312, %v311
      %v333 = vpack.c.b16 %v314, %v313
      %v334 = vpack.c.b16 %v316, %v315
      %v335 = vpack.c.b16 %v318, %v317
      %v336 = vpack.c.b16 %v320, %v319
      %v343 = vunpack.c.l.b16 %v251
      %v344 = vunpack.c.l.b16 %v252
      %v345 = vunpack.c.l.b16 %v253
      %v346 = vunpack.c.l.b16 %v254
      %v347 = vunpack.c.l.b16 %v255
      %v348 = vunpack.c.l.b16 %v256
      %v349 = vpack.c.b16 %v344, %v343
      %v350 = vpack.c.b16 %v346, %v345
      %v351 = vpack.c.b16 %v348, %v347
      %vm355 = vcmask 392192
      %v357 = vsel %vm355, %v321, 0
      %v360 = vsel %vm355, %v322, 0
      %v363 = vsel %vm355, %v323, 0
      %v366 = vsel %vm355, %v324, 0
      %v369 = vsel %vm355, %v325, 0
      %v372 = vsel %vm355, %v326, 0
      %v375 = vsel %vm355, %v327, 0
      %v378 = vsel %vm355, %v328, 0
      %v381 = vsel %vm355, %v329, 0
      %v384 = vsel %vm355, %v330, 0
      %v387 = vsel %vm355, %v331, 0
      %v390 = vsel %vm355, %v332, 0
      %v393 = vsel %vm355, %v333, 0
      %v396 = vsel %vm355, %v334, 0
      %v399 = vsel %vm355, %v335, 0
      %v402 = vsel %vm355, %v336, 0
      %404 = vmatpush.bf16.msra.mxu0 0
      %405 = vmatpush.bf16.msra.mxu0 0
      %406 = vmatpush.bf16.msra.mxu0 0
      %407 = vmatpush.bf16.msra.mxu0 0
      %408 = vmatpush.bf16.msra.mxu0 0
      %409 = vmatpush.bf16.msra.mxu0 %v351
      %410 = vmatpush.bf16.msra.mxu0 %v350
      %411 = vmatpush.bf16.msra.mxu0 %v349
      %412 = vmatmul.bf16.gmra.mxu0 %v357
      %v413 = vpop.f32.mrf.mxu0
      %v414 = vadd.f32 0.0, %v413
      %v415 = vpop.f32.mrf.mxu0
      %v416 = vadd.f32 0.0, %v415
      %417 = vmatmul.bf16.gmra.mxu0 %v360
      %v418 = vpop.f32.mrf.mxu0
      %v419 = vadd.f32 0.0, %v418
      %v420 = vpop.f32.mrf.mxu0
      %v421 = vadd.f32 0.0, %v420
      %422 = vmatmul.bf16.gmra.mxu0 %v363
      %v423 = vpop.f32.mrf.mxu0
      %v424 = vadd.f32 0.0, %v423
      %v425 = vpop.f32.mrf.mxu0
      %v426 = vadd.f32 0.0, %v425
      %427 = vmatmul.bf16.gmra.mxu0 %v366
      %v428 = vpop.f32.mrf.mxu0
      %v429 = vadd.f32 0.0, %v428
      %v430 = vpop.f32.mrf.mxu0
      %v431 = vadd.f32 0.0, %v430
      %432 = vmatmul.bf16.gmra.mxu0 %v369
      %v433 = vpop.f32.mrf.mxu0
      %v434 = vadd.f32 0.0, %v433
      %v435 = vpop.f32.mrf.mxu0
      %v436 = vadd.f32 0.0, %v435
      %437 = vmatmul.bf16.gmra.mxu0 %v372
      %v438 = vpop.f32.mrf.mxu0
      %v439 = vadd.f32 0.0, %v438
      %v440 = vpop.f32.mrf.mxu0
      %v441 = vadd.f32 0.0, %v440
      %442 = vmatmul.bf16.gmra.mxu0 %v375
      %v443 = vpop.f32.mrf.mxu0
      %v444 = vadd.f32 0.0, %v443
      %v445 = vpop.f32.mrf.mxu0
      %v446 = vadd.f32 0.0, %v445
      %447 = vmatmul.bf16.gmra.mxu0 %v378
      %v448 = vpop.f32.mrf.mxu0
      %v449 = vadd.f32 0.0, %v448
      %v450 = vpop.f32.mrf.mxu0
      %v451 = vadd.f32 0.0, %v450
      %452 = vmatmul.bf16.gmra.mxu0 %v381
      %v453 = vpop.f32.mrf.mxu0
      %v454 = vadd.f32 0.0, %v453
      %v455 = vpop.f32.mrf.mxu0
      %v456 = vadd.f32 0.0, %v455
      %457 = vmatmul.bf16.gmra.mxu0 %v384
      %v458 = vpop.f32.mrf.mxu0
      %v459 = vadd.f32 0.0, %v458
      %v460 = vpop.f32.mrf.mxu0
      %v461 = vadd.f32 0.0, %v460
      %462 = vmatmul.bf16.gmra.mxu0 %v387
      %v463 = vpop.f32.mrf.mxu0
      %v464 = vadd.f32 0.0, %v463
      %v465 = vpop.f32.mrf.mxu0
      %v466 = vadd.f32 0.0, %v465
      %467 = vmatmul.bf16.gmra.mxu0 %v390
      %v468 = vpop.f32.mrf.mxu0
      %v469 = vadd.f32 0.0, %v468
      %v470 = vpop.f32.mrf.mxu0
      %v471 = vadd.f32 0.0, %v470
      %472 = vmatmul.bf16.gmra.mxu0 %v393
      %v473 = vpop.f32.mrf.mxu0
      %v474 = vadd.f32 0.0, %v473
      %v475 = vpop.f32.mrf.mxu0
      %v476 = vadd.f32 0.0, %v475
      %477 = vmatmul.bf16.gmra.mxu0 %v396
      %v478 = vpop.f32.mrf.mxu0
      %v479 = vadd.f32 0.0, %v478
      %v480 = vpop.f32.mrf.mxu0
      %v481 = vadd.f32 0.0, %v480
      %482 = vmatmul.bf16.gmra.mxu0 %v399
      %v483 = vpop.f32.mrf.mxu0
      %v484 = vadd.f32 0.0, %v483
      %v485 = vpop.f32.mrf.mxu0
      %v486 = vadd.f32 0.0, %v485
      %487 = vmatmul.bf16.gmra.mxu0 %v402
      %v488 = vpop.f32.mrf.mxu0
      %v489 = vadd.f32 0.0, %v488
      %v490 = vpop.f32.mrf.mxu0
      %v491 = vadd.f32 0.0, %v490
      %492 = vdwg.mxu0
      %493 = vst [vmem:[%s210] sm:$0xff] %v414
      %494 = vst [vmem:[%s210 + $0x8] sm:$0xff] %v416
      %495 = vst [vmem:[%s210 + $0x10] sm:$0xff] %v419
      %496 = vst [vmem:[%s210 + $0x18] sm:$0xff] %v421
      %497 = vst [vmem:[%s210 + $0x20] sm:$0xff] %v424
      %498 = vst [vmem:[%s210 + $0x28] sm:$0xff] %v426
      %499 = vst [vmem:[%s210 + $0x30] sm:$0xff] %v429
      %500 = vst [vmem:[%s210 + $0x38] sm:$0xff] %v431
      %501 = vst [vmem:[%s210 + $0x40] sm:$0xff] %v434
      %502 = vst [vmem:[%s210 + $0x48] sm:$0xff] %v436
      %503 = vst [vmem:[%s210 + $0x50] sm:$0xff] %v439
      %504 = vst [vmem:[%s210 + $0x58] sm:$0xff] %v441
      %505 = vst [vmem:[%s210 + $0x60] sm:$0xff] %v444
      %506 = vst [vmem:[%s210 + $0x68] sm:$0xff] %v446
      %507 = vst [vmem:[%s210 + $0x70] sm:$0xff] %v449
      %508 = vst [vmem:[%s210 + $0x78] sm:$0xff] %v451
      %509 = vst [vmem:[%s210 + $0x80] sm:$0xff] %v454
      %510 = vst [vmem:[%s210 + $0x88] sm:$0xff] %v456
      %511 = vst [vmem:[%s210 + $0x90] sm:$0xff] %v459
      %512 = vst [vmem:[%s210 + $0x98] sm:$0xff] %v461
      %513 = vst [vmem:[%s210 + $0xa0] sm:$0xff] %v464
      %514 = vst [vmem:[%s210 + $0xa8] sm:$0xff] %v466
      %515 = vst [vmem:[%s210 + $0xb0] sm:$0xff] %v469
      %516 = vst [vmem:[%s210 + $0xb8] sm:$0xff] %v471
      %517 = vst [vmem:[%s210 + $0xc0] sm:$0xff] %v474
      %518 = vst [vmem:[%s210 + $0xc8] sm:$0xff] %v476
      %519 = vst [vmem:[%s210 + $0xd0] sm:$0xff] %v479
      %520 = vst [vmem:[%s210 + $0xd8] sm:$0xff] %v481
      %521 = vst [vmem:[%s210 + $0xe0] sm:$0xff] %v484
      %522 = vst [vmem:[%s210 + $0xe8] sm:$0xff] %v486
      %523 = vst [vmem:[%s210 + $0xf0] sm:$0xff] %v489
      %524 = vst [vmem:[%s210 + $0xf8] sm:$0xff] %v491
      %v525 = vadd.f32 %v414, %v416
      %v526 = vadd.f32 %v525, %v419
      %v527 = vadd.f32 %v526, %v421
      %v528 = vadd.f32 %v527, %v424
      %v529 = vadd.f32 %v528, %v426
      %v530 = vadd.f32 %v529, %v429
      %v531 = vadd.f32 %v530, %v431
      %v532 = vadd.f32 %v531, %v434
      %v533 = vadd.f32 %v532, %v436
      %v534 = vadd.f32 %v533, %v439
      %v535 = vadd.f32 %v534, %v441
      %v536 = vadd.f32 %v535, %v444
      %v537 = vadd.f32 %v536, %v446
      %v538 = vadd.f32 %v537, %v449
      %v539 = vadd.f32 %v538, %v451
      %v540 = vadd.f32 %v539, %v454
      %v541 = vadd.f32 %v540, %v456
      %v542 = vadd.f32 %v541, %v459
      %v543 = vadd.f32 %v542, %v461
      %v544 = vadd.f32 %v543, %v464
      %v545 = vadd.f32 %v544, %v466
      %v546 = vadd.f32 %v545, %v469
      %v547 = vadd.f32 %v546, %v471
      %v548 = vadd.f32 %v547, %v474
      %v549 = vadd.f32 %v548, %v476
      %v550 = vadd.f32 %v549, %v479
      %v551 = vadd.f32 %v550, %v481
      %v552 = vadd.f32 %v551, %v484
      %v553 = vadd.f32 %v552, %v486
      %v554 = vadd.f32 %v553, %v489
      %v555 = vadd.f32 %v554, %v491
      %v556 = vrot.slane %v555, 4
      %v557 = vadd.f32 %v555, %v556
      %v558 = vrot.slane %v557, 2
      %v559 = vadd.f32 %v557, %v558
      %v560 = vrot.slane %v559, 1
      %v561 = vadd.f32 %v559, %v560
      %562 = vst [vmem:[%s214] sm:$0x1] %v561
      %v563 = vmul.f32 %v414, %v414
      %v564 = vmul.f32 %v416, %v416
      %v565 = vmul.f32 %v419, %v419
      %v566 = vmul.f32 %v421, %v421
      %v567 = vmul.f32 %v424, %v424
      %v568 = vmul.f32 %v426, %v426
      %v569 = vmul.f32 %v429, %v429
      %v570 = vmul.f32 %v431, %v431
      %v571 = vmul.f32 %v434, %v434
      %v572 = vmul.f32 %v436, %v436
      %v573 = vmul.f32 %v439, %v439
      %v574 = vmul.f32 %v441, %v441
      %v575 = vmul.f32 %v444, %v444
      %v576 = vmul.f32 %v446, %v446
      %v577 = vmul.f32 %v449, %v449
      %v578 = vmul.f32 %v451, %v451
      %v579 = vmul.f32 %v454, %v454
      %v580 = vmul.f32 %v456, %v456
      %v581 = vmul.f32 %v459, %v459
      %v582 = vmul.f32 %v461, %v461
      %v583 = vmul.f32 %v464, %v464
      %v584 = vmul.f32 %v466, %v466
      %v585 = vmul.f32 %v469, %v469
      %v586 = vmul.f32 %v471, %v471
      %v587 = vmul.f32 %v474, %v474
      %v588 = vmul.f32 %v476, %v476
      %v589 = vmul.f32 %v479, %v479
      %v590 = vmul.f32 %v481, %v481
      %v591 = vmul.f32 %v484, %v484
      %v592 = vmul.f32 %v486, %v486
      %v593 = vmul.f32 %v489, %v489
      %v594 = vmul.f32 %v491, %v491
      %v595 = vadd.f32 %v563, %v564
      %v596 = vadd.f32 %v595, %v565
      %v597 = vadd.f32 %v596, %v566
      %v598 = vadd.f32 %v597, %v567
      %v599 = vadd.f32 %v598, %v568
      %v600 = vadd.f32 %v599, %v569
      %v601 = vadd.f32 %v600, %v570
      %v602 = vadd.f32 %v601, %v571
      %v603 = vadd.f32 %v602, %v572
      %v604 = vadd.f32 %v603, %v573
      %v605 = vadd.f32 %v604, %v574
      %v606 = vadd.f32 %v605, %v575
      %v607 = vadd.f32 %v606, %v576
      %v608 = vadd.f32 %v607, %v577
      %v609 = vadd.f32 %v608, %v578
      %v610 = vadd.f32 %v609, %v579
      %v611 = vadd.f32 %v610, %v580
      %v612 = vadd.f32 %v611, %v581
      %v613 = vadd.f32 %v612, %v582
      %v614 = vadd.f32 %v613, %v583
      %v615 = vadd.f32 %v614, %v584
      %v616 = vadd.f32 %v615, %v585
      %v617 = vadd.f32 %v616, %v586
      %v618 = vadd.f32 %v617, %v587
      %v619 = vadd.f32 %v618, %v588
      %v620 = vadd.f32 %v619, %v589
      %v621 = vadd.f32 %v620, %v590
      %v622 = vadd.f32 %v621, %v591
      %v623 = vadd.f32 %v622, %v592
      %v624 = vadd.f32 %v623, %v593
      %v625 = vadd.f32 %v624, %v594
      %v626 = vrot.slane %v625, 4
      %v627 = vadd.f32 %v625, %v626
      %v628 = vrot.slane %v627, 2
      %v629 = vadd.f32 %v627, %v628
      %v630 = vrot.slane %v629, 1
      %v631 = vadd.f32 %v629, %v630
      %632 = vst [vmem:[%s217] sm:$0x1] %v631
      %s633 = smul.u32 32, %s16
      %p634 = scmp.lt.s32.totalorder %s633, 63
      %s635 = scalar_select %p634, %s633, 63
      %s636 = smul.addr %s635, 8
      %s637 = scalar_lea.vmem %s2, %s636
      %p638 = scmp.lt.s32.totalorder %s16, 1
      %s639 = scalar_select %p638, %s16, 1
      %s640 = scalar_lea.vmem %s3, %s639
      %p641 = scmp.lt.s32.totalorder %s16, 1
      %s642 = scalar_select %p641, %s16, 1
      %s643 = scalar_lea.vmem %s4, %s642
      // Predicated region
      $region29: #{conv_bn_relu.2} parent=27 // pred_check
        %p644 = pneg %p81
      $region30: #{conv_bn_relu.2} parent=27 // pred_check_branch
        %646 = sbr.rel (%p644) target = $region32
      $region31: #{conv_bn_relu.2} parent=27 // pred_region
        %s647 = smul.u32 32, %s16
      $region32: #{conv_bn_relu.2} parent=27 // pred_fallthru
        _
      // Predicated region
      $region33: #{conv_bn_relu.2} parent=27 // pred_check
        %p648 = pneg %p107
      $region34: #{conv_bn_relu.2} parent=27 // pred_check_branch
        %650 = sbr.rel (%p648) target = $region36
      $region35: #{conv_bn_relu.2} parent=27 // pred_region
        _
      $region36: #{conv_bn_relu.2} parent=27 // pred_fallthru
        _
      // Predicated region
      $region37: #{conv_bn_relu.2} parent=27 // pred_check
        %p651 = pneg %p133
      $region38: #{conv_bn_relu.2} parent=27 // pred_check_branch
        %653 = sbr.rel (%p651) target = $region40
      $region39: #{conv_bn_relu.2} parent=27 // pred_region
        _
      $region40: #{conv_bn_relu.2} parent=27 // pred_fallthru
        _
    $region28: #{conv_bn_relu.2} parent=5 // pred_fallthru
      _
    %p654 = scmp.le.s32.totalorder 2, %s11
    // Predicated region
    $region41: #{conv_bn_relu.2} parent=5 // pred_check
      %p655 = pneg %p654
    $region42: #{conv_bn_relu.2} parent=5 // pred_check_branch
      %657 = sbr.rel (%p655) target = $region44
    $region43: #{conv_bn_relu.2} parent=5 // pred_region
      %s658 = ssub.s32 %s11, 2
      // Predicated region
      $region45: #{conv_bn_relu.2} parent=43 // pred_check
        %p659 = pneg %p87
      $region46: #{conv_bn_relu.2} parent=43 // pred_check_branch
        %661 = sbr.rel (%p659) target = $region48
      $region47: #{conv_bn_relu.2} parent=43 // pred_region
        %s662 = smul.u32 32, %s17
        %p663 = scmp.lt.s32.totalorder %s662, 63
        %s664 = scalar_select %p663, %s662, 63
        %s665 = smul.addr %s664, 8
        %s666 = scalar_lea.vmem %s2, %s665
      $region48: #{conv_bn_relu.2} parent=43 // pred_fallthru
        _
      // Predicated region
      $region49: #{conv_bn_relu.2} parent=43 // pred_check
        %p667 = pneg %p113
      $region50: #{conv_bn_relu.2} parent=43 // pred_check_branch
        %669 = sbr.rel (%p667) target = $region52
      $region51: #{conv_bn_relu.2} parent=43 // pred_region
        %p670 = scmp.lt.s32.totalorder %s17, 1
        %s671 = scalar_select %p670, %s17, 1
        %s672 = scalar_lea.vmem %s3, %s671
      $region52: #{conv_bn_relu.2} parent=43 // pred_fallthru
        _
      // Predicated region
      $region53: #{conv_bn_relu.2} parent=43 // pred_check
        %p673 = pneg %p139
      $region54: #{conv_bn_relu.2} parent=43 // pred_check_branch
        %675 = sbr.rel (%p673) target = $region56
      $region55: #{conv_bn_relu.2} parent=43 // pred_region
        %p676 = scmp.lt.s32.totalorder %s17, 1
        %s677 = scalar_select %p676, %s17, 1
        %s678 = scalar_lea.vmem %s4, %s677
      $region56: #{conv_bn_relu.2} parent=43 // pred_fallthru
        _
    $region44: #{conv_bn_relu.2} parent=5 // pred_fallthru
      _
  $region6: #{conv_bn_relu.2} parent=0 // loop_footer
    %s15 = sadd.s32 1, %s11
  $region7: #{conv_bn_relu.2} parent=0 // loop_footer_branch
    %10 = sbr.rel target = $region3
  $region8: #{conv_bn_relu.2} parent=0 // loop_exit
    _

</llo_original>
